<compile_context>
chip_gen: v7x
topology: tpu7x:2x2x1
jax: 0.10.0
libtpu: 0.0.40
codegen_flags: <defaults>
</compile_context>

<pallas_src>
import jax
import jax.numpy as jnp
from jax.experimental import pallas as pl
from jax.experimental.pallas import tpu as pltpu

LN_EPS = 1e-5  # torch.nn.LayerNorm default


def _round_up(x, m):
    return ((x + m - 1) // m) * m


def _choose_tb(B):
    """Batch tile (lane axis) -> must be a multiple of 128."""
    if B <= 256:
        return _round_up(B, 128)
    # Keep >= 2 grid steps so v7x's two TensorCores both get work; cap at 2048.
    return min(2048, _round_up(pl.cdiv(B, 2), 256))


def _make_kernel(S, A, FC1, FC2, offs):
    SA = S + A
    o_w1, o_w2, o_w3, o_v = offs["w1t"], offs["w2t"], offs["w3t"], offs["vec"]
    VROWS = max(FC1, FC2, S)

    def _ln(x, gamma, beta, n_feat):
        # One-pass LayerNorm over the feature (sublane) axis.
        inv_n = 1.0 / n_feat
        mu = jnp.sum(x, axis=0, keepdims=True) * inv_n           # (1, TB)
        ex2 = jnp.sum(x * x, axis=0, keepdims=True) * inv_n      # (1, TB)
        var = jnp.maximum(ex2 - mu * mu, 0.0)
        inv = jax.lax.rsqrt(var + LN_EPS)
        return (x - mu) * inv * gamma + beta

    def kernel(xa_ref, p_ref, out_ref):
        # Parameter slab: single block with a constant index map -> fetched
        # once, not re-DMA'd on subsequent grid steps.  Weights are stored
        # transposed; bias/gamma/beta are columns of one vector block.
        w1t = p_ref[o_w1:o_w1 + FC1, 0:SA]       # (FC1, S+A)
        w2t = p_ref[o_w2:o_w2 + FC2, 0:FC1]      # (FC2, FC1)
        w3t = p_ref[o_w3:o_w3 + S, 0:FC2]        # (S,   FC2)
        vec = p_ref[o_v:o_v + VROWS, 0:8]        # cols: b1 g1 be1 b2 g2 be2 b3
        b1, g1, be1 = vec[0:FC1, 0:1], vec[0:FC1, 1:2], vec[0:FC1, 2:3]
        b2, g2, be2 = vec[0:FC2, 3:4], vec[0:FC2, 4:5], vec[0:FC2, 5:6]
        b3 = vec[0:S, 6:7]

        xa = xa_ref[...]                          # (S+A, TB)  lane-dense

        h1 = jnp.dot(w1t, xa, preferred_element_type=jnp.float32) + b1
        h1 = _ln(jnp.maximum(h1, 0.0), g1, be1, FC1)

        h2 = jnp.dot(w2t, h1, preferred_element_type=jnp.float32) + b2
        h2 = _ln(jnp.maximum(h2, 0.0), g2, be2, FC2)

        out = jnp.dot(w3t, h2, preferred_element_type=jnp.float32) + b3
        out_ref[...] = out.astype(out_ref.dtype)  # (S, TB) lane-dense store

    return kernel


def pack_params(params, S, A, FC1, FC2):
    """Pack all params (transposed) into one [R, C] f32 slab, rows 8-aligned.

    Offsets returned here are the single source of truth consumed by
    _make_kernel (VMEM refs have no runtime bounds check).
    """
    SA = S + A
    VROWS = max(FC1, FC2, S)
    C = max(SA, FC1, FC2, 8)
    offs, r = {}, 0
    for name, rows in (("w1t", FC1), ("w2t", FC2), ("w3t", S), ("vec", VROWS)):
        offs[name] = r
        r += _round_up(rows, 8)
    slab = jnp.zeros((r, C), jnp.float32)

    def put(sl, name, arr):
        rr, cc = arr.shape
        return sl.at[offs[name]:offs[name] + rr, 0:cc].set(arr)

    slab = put(slab, "w1t", params["w1"].T)   # (FC1, S+A)
    slab = put(slab, "w2t", params["w2"].T)   # (FC2, FC1)
    slab = put(slab, "w3t", params["w3"].T)   # (S,   FC2)

    vec = jnp.zeros((VROWS, 8), jnp.float32)
    vec = vec.at[0:FC1, 0].set(params["b1"].reshape(-1))
    vec = vec.at[0:FC1, 1].set(params["g1"].reshape(-1))
    vec = vec.at[0:FC1, 2].set(params["be1"].reshape(-1))
    vec = vec.at[0:FC2, 3].set(params["b2"].reshape(-1))
    vec = vec.at[0:FC2, 4].set(params["g2"].reshape(-1))
    vec = vec.at[0:FC2, 5].set(params["be2"].reshape(-1))
    vec = vec.at[0:S, 6].set(params["b3"].reshape(-1))
    slab = put(slab, "vec", vec)
    return slab, offs


def system_network_forward(state, action, slab, offs, FC1, FC2):
    """state: [B, S], action: [B, A] -> predicted next state [B, S]."""
    B, S = state.shape
    _, A = action.shape
    SA = S + A

    TB = _choose_tb(B)
    padded_B = _round_up(B, TB)

    # Cheap wrapper-side concat + transpose -> lane-dense (S+A, B) input with a
    # single K = S+A matmul in the kernel (one MXU pass for fc1).
    xa_t = jnp.concatenate([state, action], axis=1).T          # (S+A, B)
    if padded_B != B:
        xa_t = jnp.pad(xa_t, ((0, 0), (0, padded_B - B)))

    out_t = pl.pallas_call(
        _make_kernel(S, A, FC1, FC2, offs),
        out_shape=jax.ShapeDtypeStruct((S, padded_B), jnp.float32),
        grid=(padded_B // TB,),
        in_specs=[
            pl.BlockSpec((SA, TB), lambda i: (0, i)),
            # full-size block, constant index -> single DMA, VMEM-resident
            pl.BlockSpec(slab.shape, lambda i: (0, 0)),
        ],
        out_specs=pl.BlockSpec((S, TB), lambda i: (0, i)),
        compiler_params=pltpu.CompilerParams(
            dimension_semantics=("parallel",)),  # v7x: split batch over 2 TCs
    )(xa_t, slab)

    out = out_t.T                                               # (padded_B, S)
    return out[:B] if padded_B != B else out


def init_params(key, input_dim, n_actions, fc1_dims, fc2_dims):
    """Deterministic synthetic init (PyTorch-like uniform fan-in bounds)."""
    ks = jax.random.split(key, 6)

    def linear(kw, kb, fan_in, fan_out):
        bound = 1.0 / jnp.sqrt(fan_in)
        w = jax.random.uniform(kw, (fan_in, fan_out), jnp.float32, -bound, bound)
        b = jax.random.uniform(kb, (1, fan_out), jnp.float32, -bound, bound)
        return w, b

    w1, b1 = linear(ks[0], ks[1], input_dim + n_actions, fc1_dims)
    w2, b2 = linear(ks[2], ks[3], fc1_dims, fc2_dims)
    w3, b3 = linear(ks[4], ks[5], fc2_dims, input_dim)
    return {
        "w1": w1, "b1": b1,
        "g1": jnp.ones((1, fc1_dims), jnp.float32),
        "be1": jnp.zeros((1, fc1_dims), jnp.float32),
        "w2": w2, "b2": b2,
        "g2": jnp.ones((1, fc2_dims), jnp.float32),
        "be2": jnp.zeros((1, fc2_dims), jnp.float32),
        "w3": w3, "b3": b3,
    }


def reference_forward(state, action, p):
    xa = jnp.concatenate([state, action], axis=1)

    def ln(x, g, b):
        mu = jnp.mean(x, axis=-1, keepdims=True)
        var = jnp.mean((x - mu) ** 2, axis=-1, keepdims=True)
        return (x - mu) / jnp.sqrt(var + LN_EPS) * g + b

    h1 = ln(jax.nn.relu(xa @ p["w1"] + p["b1"]), p["g1"], p["be1"])
    h2 = ln(jax.nn.relu(h1 @ p["w2"] + p["b2"]), p["g2"], p["be2"])
    return h2 @ p["w3"] + p["b3"]


if __name__ == "__main__":
    # Shapes consistent with the module: input_dims=(8,), n_actions=4,
    # fc1_dims=32, fc2_dims=32, batch=8.
    B, S, A, FC1, FC2 = 8, 8, 4, 32, 32

    key = jax.random.PRNGKey(0)
    k_state, k_action, k_params, k_big = jax.random.split(key, 4)
    state = jax.random.normal(k_state, (B, S), jnp.float32)
    action = jax.random.normal(k_action, (B, A), jnp.float32)
    params = init_params(k_params, S, A, FC1, FC2)
    slab, offs = pack_params(params, S, A, FC1, FC2)

    out = jax.block_until_ready(
        system_network_forward(state, action, slab, offs, FC1, FC2))
    ref = reference_forward(state, action, params)
    assert out.shape == (B, S)
    assert jnp.allclose(out, ref, atol=1e-4, rtol=1e-4), "mismatch vs reference (B=8)"

    # Larger batch: exercises multi-tile grid (2 steps of TB=256) + padding.
    B2 = 300
    ks, ka = jax.random.split(k_big)
    state2 = jax.random.normal(ks, (B2, S), jnp.float32)
    action2 = jax.random.normal(ka, (B2, A), jnp.float32)
    out2 = jax.block_until_ready(
        system_network_forward(state2, action2, slab, offs, FC1, FC2))
    ref2 = reference_forward(state2, action2, params)
    assert out2.shape == (B2, S)
    assert jnp.allclose(out2, ref2, atol=1e-4, rtol=1e-4), "mismatch vs reference (B=300)"

    print("KERNEL_OK")
</pallas_src>

<mosaic_0001>
module attributes {stable_mosaic.version = 11 : i64} {
  func.func @kernel(%arg0: i32, %arg1: memref<12x128xf32, #tpu.memory_space<vmem>>, %arg2: memref<104x32xf32, #tpu.memory_space<vmem>>, %arg3: memref<8x128xf32, #tpu.memory_space<vmem>>) attributes {dimension_semantics = [#tpu.dimension_semantics<parallel>], iteration_bounds = array<i64: 1>, scalar_prefetch = 0 : i64, scratch_operands = 0 : i64, tpu.core_type = #tpu.core_type<tc>, window_params = [{transform_indices = @transform_0, window_bounds = array<i64: 12, 128>}, {pipeline_mode = #tpu.pipeline_mode<synchronous>, transform_indices = @transform_1, window_bounds = array<i64: 104, 32>}, {transform_indices = @transform_2, window_bounds = array<i64: 8, 128>}]} {
    %c0 = arith.constant 0 : index
    %c0_0 = arith.constant 0 : index
    %0 = vector.load %arg2[%c0, %c0_0] : memref<104x32xf32, #tpu.memory_space<vmem>>, vector<32x12xf32>
    %c32 = arith.constant 32 : index
    %c0_1 = arith.constant 0 : index
    %1 = vector.load %arg2[%c32, %c0_1] : memref<104x32xf32, #tpu.memory_space<vmem>>, vector<32x32xf32>
    %c64 = arith.constant 64 : index
    %c0_2 = arith.constant 0 : index
    %2 = vector.load %arg2[%c64, %c0_2] : memref<104x32xf32, #tpu.memory_space<vmem>>, vector<8x32xf32>
    %c72 = arith.constant 72 : index
    %c0_3 = arith.constant 0 : index
    %3 = vector.load %arg2[%c72, %c0_3] : memref<104x32xf32, #tpu.memory_space<vmem>>, vector<32x8xf32>
    %4 = vector.extract_strided_slice %3 {offsets = [0, 0], sizes = [32, 1], strides = [1, 1]} : vector<32x8xf32> to vector<32x1xf32>
    %5 = vector.extract_strided_slice %3 {offsets = [0, 1], sizes = [32, 1], strides = [1, 1]} : vector<32x8xf32> to vector<32x1xf32>
    %6 = vector.extract_strided_slice %3 {offsets = [0, 2], sizes = [32, 1], strides = [1, 1]} : vector<32x8xf32> to vector<32x1xf32>
    %7 = vector.extract_strided_slice %3 {offsets = [0, 3], sizes = [32, 1], strides = [1, 1]} : vector<32x8xf32> to vector<32x1xf32>
    %8 = vector.extract_strided_slice %3 {offsets = [0, 4], sizes = [32, 1], strides = [1, 1]} : vector<32x8xf32> to vector<32x1xf32>
    %9 = vector.extract_strided_slice %3 {offsets = [0, 5], sizes = [32, 1], strides = [1, 1]} : vector<32x8xf32> to vector<32x1xf32>
    %10 = vector.extract_strided_slice %3 {offsets = [0, 6], sizes = [8, 1], strides = [1, 1]} : vector<32x8xf32> to vector<8x1xf32>
    %c0_4 = arith.constant 0 : index
    %c0_5 = arith.constant 0 : index
    %11 = vector.load %arg1[%c0_4, %c0_5] : memref<12x128xf32, #tpu.memory_space<vmem>>, vector<12x128xf32>
    %cst = arith.constant dense<0.000000e+00> : vector<32x128xf32>
    %12 = tpu.matmul %0, %11, %cst {dimension_numbers = #tpu.dot_dimension_numbers<[1], [0], [0], [1], [0, 0, 1, 1], [], []>} : vector<32x12xf32>, vector<12x128xf32>, vector<32x128xf32> -> vector<32x128xf32>
    %13 = vector.broadcast %4 : vector<32x1xf32> to vector<32x128xf32>
    %14 = arith.addf %12, %13 : vector<32x128xf32>
    %cst_6 = arith.constant 0.000000e+00 : f32
    %15 = vector.broadcast %cst_6 : f32 to vector<32x128xf32>
    %16 = arith.maximumf %14, %15 : vector<32x128xf32>
    %cst_7 = arith.constant dense<0.000000e+00> : vector<128xf32>
    %17 = vector.multi_reduction <add>, %16, %cst_7 [0] : vector<32x128xf32> to vector<128xf32>
    %18 = vector.shape_cast %17 : vector<128xf32> to vector<1x128xf32>
    %cst_8 = arith.constant 3.125000e-02 : f32
    %19 = vector.broadcast %cst_8 : f32 to vector<1x128xf32>
    %20 = arith.mulf %18, %19 : vector<1x128xf32>
    %21 = arith.mulf %16, %16 : vector<32x128xf32>
    %cst_9 = arith.constant dense<0.000000e+00> : vector<128xf32>
    %22 = vector.multi_reduction <add>, %21, %cst_9 [0] : vector<32x128xf32> to vector<128xf32>
    %23 = vector.shape_cast %22 : vector<128xf32> to vector<1x128xf32>
    %cst_10 = arith.constant 3.125000e-02 : f32
    %24 = vector.broadcast %cst_10 : f32 to vector<1x128xf32>
    %25 = arith.mulf %23, %24 : vector<1x128xf32>
    %26 = arith.mulf %20, %20 : vector<1x128xf32>
    %27 = arith.subf %25, %26 : vector<1x128xf32>
    %cst_11 = arith.constant 0.000000e+00 : f32
    %28 = vector.broadcast %cst_11 : f32 to vector<1x128xf32>
    %29 = arith.maximumf %27, %28 : vector<1x128xf32>
    %cst_12 = arith.constant 9.99999974E-6 : f32
    %30 = vector.broadcast %cst_12 : f32 to vector<1x128xf32>
    %31 = arith.addf %29, %30 : vector<1x128xf32>
    %32 = math.rsqrt %31 : vector<1x128xf32>
    %33 = vector.broadcast %20 : vector<1x128xf32> to vector<32x128xf32>
    %34 = arith.subf %16, %33 : vector<32x128xf32>
    %35 = vector.broadcast %32 : vector<1x128xf32> to vector<32x128xf32>
    %36 = arith.mulf %34, %35 : vector<32x128xf32>
    %37 = vector.broadcast %5 : vector<32x1xf32> to vector<32x128xf32>
    %38 = arith.mulf %36, %37 : vector<32x128xf32>
    %39 = vector.broadcast %6 : vector<32x1xf32> to vector<32x128xf32>
    %40 = arith.addf %38, %39 : vector<32x128xf32>
    %cst_13 = arith.constant dense<0.000000e+00> : vector<32x128xf32>
    %41 = tpu.matmul %1, %40, %cst_13 {dimension_numbers = #tpu.dot_dimension_numbers<[1], [0], [0], [1], [0, 0, 1, 1], [], []>} : vector<32x32xf32>, vector<32x128xf32>, vector<32x128xf32> -> vector<32x128xf32>
    %42 = vector.broadcast %7 : vector<32x1xf32> to vector<32x128xf32>
    %43 = arith.addf %41, %42 : vector<32x128xf32>
    %cst_14 = arith.constant 0.000000e+00 : f32
    %44 = vector.broadcast %cst_14 : f32 to vector<32x128xf32>
    %45 = arith.maximumf %43, %44 : vector<32x128xf32>
    %cst_15 = arith.constant dense<0.000000e+00> : vector<128xf32>
    %46 = vector.multi_reduction <add>, %45, %cst_15 [0] : vector<32x128xf32> to vector<128xf32>
    %47 = vector.shape_cast %46 : vector<128xf32> to vector<1x128xf32>
    %cst_16 = arith.constant 3.125000e-02 : f32
    %48 = vector.broadcast %cst_16 : f32 to vector<1x128xf32>
    %49 = arith.mulf %47, %48 : vector<1x128xf32>
    %50 = arith.mulf %45, %45 : vector<32x128xf32>
    %cst_17 = arith.constant dense<0.000000e+00> : vector<128xf32>
    %51 = vector.multi_reduction <add>, %50, %cst_17 [0] : vector<32x128xf32> to vector<128xf32>
    %52 = vector.shape_cast %51 : vector<128xf32> to vector<1x128xf32>
    %cst_18 = arith.constant 3.125000e-02 : f32
    %53 = vector.broadcast %cst_18 : f32 to vector<1x128xf32>
    %54 = arith.mulf %52, %53 : vector<1x128xf32>
    %55 = arith.mulf %49, %49 : vector<1x128xf32>
    %56 = arith.subf %54, %55 : vector<1x128xf32>
    %cst_19 = arith.constant 0.000000e+00 : f32
    %57 = vector.broadcast %cst_19 : f32 to vector<1x128xf32>
    %58 = arith.maximumf %56, %57 : vector<1x128xf32>
    %cst_20 = arith.constant 9.99999974E-6 : f32
    %59 = vector.broadcast %cst_20 : f32 to vector<1x128xf32>
    %60 = arith.addf %58, %59 : vector<1x128xf32>
    %61 = math.rsqrt %60 : vector<1x128xf32>
    %62 = vector.broadcast %49 : vector<1x128xf32> to vector<32x128xf32>
    %63 = arith.subf %45, %62 : vector<32x128xf32>
    %64 = vector.broadcast %61 : vector<1x128xf32> to vector<32x128xf32>
    %65 = arith.mulf %63, %64 : vector<32x128xf32>
    %66 = vector.broadcast %8 : vector<32x1xf32> to vector<32x128xf32>
    %67 = arith.mulf %65, %66 : vector<32x128xf32>
    %68 = vector.broadcast %9 : vector<32x1xf32> to vector<32x128xf32>
    %69 = arith.addf %67, %68 : vector<32x128xf32>
    %cst_21 = arith.constant dense<0.000000e+00> : vector<8x128xf32>
    %70 = tpu.matmul %2, %69, %cst_21 {dimension_numbers = #tpu.dot_dimension_numbers<[1], [0], [0], [1], [0, 0, 1, 1], [], []>} : vector<8x32xf32>, vector<32x128xf32>, vector<8x128xf32> -> vector<8x128xf32>
    %71 = vector.broadcast %10 : vector<8x1xf32> to vector<8x128xf32>
    %72 = arith.addf %70, %71 : vector<8x128xf32>
    %c0_22 = arith.constant 0 : index
    %c0_23 = arith.constant 0 : index
    %73 = vector.load %arg3[%c0_22, %c0_23] : memref<8x128xf32, #tpu.memory_space<vmem>>, vector<8x128xf32>
    tpu.vector_store %arg3[%c0_22, %c0_23], %72 {strides = array<i32>} : memref<8x128xf32, #tpu.memory_space<vmem>>, vector<8x128xf32>,
    return
  }
  func.func @transform_0(%arg0: i32) -> (i32, i32) {
    %c0_i32 = arith.constant 0 : i32
    %c0_i32_0 = arith.constant 0 : i32
    return %c0_i32, %arg0 : i32, i32
  }
  func.func @transform_1(%arg0: i32) -> (i32, i32) {
    %c0_i32 = arith.constant 0 : i32
    %c0_i32_0 = arith.constant 0 : i32
    %c0_i32_1 = arith.constant 0 : i32
    return %c0_i32, %c0_i32_0 : i32, i32
  }
  func.func @transform_2(%arg0: i32) -> (i32, i32) {
    %c0_i32 = arith.constant 0 : i32
    %c0_i32_0 = arith.constant 0 : i32
    return %c0_i32, %arg0 : i32, i32
  }
}

</mosaic_0001>

<llo_original>
// kernel: tpu_custom_call.1
$region0: #{tpu_custom_call.1}
  #allocation0 [shape = 'u32[]', space=smem, size = 0x4, offset = 0x4, fixed_abs, tag = 'smem constant byte address 0x4 - core index']
  #allocation1 [shape = 'u32[144,128]{1,0:T(1,128)}', space=vmem, size = 0x12000, scoped, tag = 'internal scratch']
  %s0 = inlined_call_operand.vmem [shape: f32[12,128], index: 0, kind: input, shape index: {}]
  %s1 = inlined_call_operand.vmem [shape: f32[104,32], index: 1, kind: input, shape index: {}]
  %s2 = inlined_call_operand.hbm [shape: f32[8,128], index: 2, kind: output, shape index: {}]
  %s3 = sld [smem:[#allocation0]]
  $region18: #{tpu_custom_call.1} parent=0
    _
  %s5 = ssub.s32 1, %s3
  %s6 = scalar_select 0, %s5, %s3
  $region1: #{tpu_custom_call.1} parent=0
    #allocation2 [shape = 'u8[4096]{0}', space=vmem, size = 0x1000, scoped, tag = 'output window, operand 0, single buffered']
    #allocation3 [shape = 's32[1]{0}', space=sflag, size = 0x4, scoped, tag = 'scoped memory for tpu_custom_call.1']
    %7 = vsyncpa [#allocation3], 0
    // Predicated region
    $region2: #{tpu_custom_call.1} parent=1 // pred_check
      _
    $region3: #{tpu_custom_call.1} parent=1 // pred_check_branch
      %9 = sbr.rel (0) target = $region5
    $region4: #{tpu_custom_call.1} parent=1 // pred_region
      _
    $region5: #{tpu_custom_call.1} parent=1 // pred_fallthru
      _
    // Predicated region
    $region6: #{tpu_custom_call.1} parent=1 // pred_check
      _
    $region7: #{tpu_custom_call.1} parent=1 // pred_check_branch
      %11 = sbr.rel (0) target = $region9
    $region8: #{tpu_custom_call.1} parent=1 // pred_region
      _
    $region9: #{tpu_custom_call.1} parent=1 // pred_fallthru
      _
    %v12 = vld [vmem:[%s1] sm:$0xff]
    %v13 = vld [vmem:[%s1 + $0x8] sm:$0xff]
    %v14 = vld [vmem:[%s1 + $0x10] sm:$0xff]
    %v15 = vld [vmem:[%s1 + $0x18] sm:$0xff]
    %v16 = vld [vmem:[%s1 + $0x20] sm:$0xff]
    %v17 = vld [vmem:[%s1 + $0x28] sm:$0xff]
    %v18 = vld [vmem:[%s1 + $0x30] sm:$0xff]
    %v19 = vld [vmem:[%s1 + $0x38] sm:$0xff]
    %v20 = vld [vmem:[%s1 + $0x40] sm:$0xff]
    %v21 = vld [vmem:[%s1 + $0x48] sm:$0xff]
    %v22 = vld [vmem:[%s1 + $0x50] sm:$0xff]
    %v23 = vld [vmem:[%s1 + $0x58] sm:$0xff]
    %v24 = vld [vmem:[%s1 + $0x60] sm:$0xff]
    %v25 = vld [vmem:[%s0] sm:$0xff]
    %v26 = vld [vmem:[%s0 + $0x8] sm:$0xf]
    %28 = vset.pattern.permute.xlu0 0
    %29 = vperm.xlu0 %28, %v21
    %v30 = vpop.permute.xlu0 %29
    %33 = vset.pattern.permute.xlu0 0
    %34 = vperm.xlu0 %33, %v22
    %v35 = vpop.permute.xlu0 %34
    %38 = vset.pattern.permute.xlu0 0
    %39 = vperm.xlu0 %38, %v23
    %v40 = vpop.permute.xlu0 %39
    %43 = vset.pattern.permute.xlu0 0
    %44 = vperm.xlu0 %43, %v24
    %v45 = vpop.permute.xlu0 %44
    %vm47 = vcmask 97280
    %v49 = vsel %vm47, %v12, 0
    %v52 = vsel %vm47, %v13, 0
    %v55 = vsel %vm47, %v14, 0
    %v58 = vsel %vm47, %v15, 0
    %vm60 = vcmask 1043456
    %v62 = vsel %vm60, %v26, 0
    %64 = vmatprep.subr.mxu0 0.0
    %65 = vmatpush1.msra.mxu0 %v25
    %66 = vmatprep.subr.mxu0 0.0
    %67 = vmatpush1.msra.mxu0 %v62
    %68 = vmatprep.subr.mxu0 0.0
    %69 = vmatpush1.msra.mxu0 0.0
    %70 = vmatprep.subr.mxu0 0.0
    %71 = vmatpush1.msra.mxu0 0.0
    %72 = vmatprep.subr.mxu0 0.0
    %73 = vmatpush1.msra.mxu0 0.0
    %74 = vmatprep.subr.mxu0 0.0
    %75 = vmatpush1.msra.mxu0 0.0
    %76 = vmatprep.subr.mxu0 0.0
    %77 = vmatpush1.msra.mxu0 0.0
    %78 = vmatprep.subr.mxu0 0.0
    %79 = vmatpush1.msra.mxu0 0.0
    %80 = vmatprep.subr.mxu0 0.0
    %81 = vmatpush1.msra.mxu0 0.0
    %82 = vmatprep.subr.mxu0 0.0
    %83 = vmatpush1.msra.mxu0 0.0
    %84 = vmatprep.subr.mxu0 0.0
    %85 = vmatpush1.msra.mxu0 0.0
    %86 = vmatprep.subr.mxu0 0.0
    %87 = vmatpush1.msra.mxu0 0.0
    %88 = vmatprep.subr.mxu0 0.0
    %89 = vmatpush1.msra.mxu0 0.0
    %90 = vmatprep.subr.mxu0 0.0
    %91 = vmatpush1.msra.mxu0 0.0
    %92 = vmatprep.subr.mxu0 0.0
    %93 = vmatpush1.msra.mxu0 0.0
    %94 = vmatprep.subr.mxu0 0.0
    %95 = vmatpush1.msra.mxu0 0.0
    %96 = vmatprep.subr.mxu0 0.0
    %97 = vmatpush1.msra.mxu0 0.0
    %98 = vmatprep.subr.mxu0 0.0
    %99 = vmatpush1.msra.mxu0 0.0
    %100 = vmatprep.subr.mxu0 0.0
    %101 = vmatpush1.msra.mxu0 0.0
    %102 = vmatprep.subr.mxu0 0.0
    %103 = vmatpush1.msra.mxu0 0.0
    %104 = vmatprep.subr.mxu0 0.0
    %105 = vmatpush1.msra.mxu0 0.0
    %106 = vmatprep.subr.mxu0 0.0
    %107 = vmatpush1.msra.mxu0 0.0
    %108 = vmatprep.subr.mxu0 0.0
    %109 = vmatpush1.msra.mxu0 0.0
    %110 = vmatprep.subr.mxu0 0.0
    %111 = vmatpush1.msra.mxu0 0.0
    %112 = vmatprep.subr.mxu0 0.0
    %113 = vmatpush1.msra.mxu0 0.0
    %114 = vmatprep.subr.mxu0 0.0
    %115 = vmatpush1.msra.mxu0 0.0
    %116 = vmatprep.subr.mxu0 0.0
    %117 = vmatpush1.msra.mxu0 0.0
    %118 = vmatprep.subr.mxu0 0.0
    %119 = vmatpush1.msra.mxu0 0.0
    %120 = vmatprep.subr.mxu0 0.0
    %121 = vmatpush1.msra.mxu0 0.0
    %122 = vmatprep.subr.mxu0 0.0
    %123 = vmatpush1.msra.mxu0 0.0
    %124 = vmatprep.subr.mxu0 0.0
    %125 = vmatpush1.msra.mxu0 0.0
    %126 = vmatprep.subr.mxu0 0.0
    %127 = vmatpush1.msra.mxu0 0.0
    %128 = vmatprep.mubr.f32.mxu0 0.0
    %129 = vmatmul.mubr.f32.gmra.mrb[0].mxu0 %v49
    %v130 = vpop.f32.mrb[0].mxu0
    %v131 = vadd.f32 %v30, %v130
    %v132 = vpop.f32.mrb[0].mxu0
    %133 = vmatprep.mubr.f32.mxu0 0.0
    %134 = vmatmul.mubr.f32.gmra.mrb[0].mxu0 %v52
    %v135 = vpop.f32.mrb[0].mxu0
    %v136 = vadd.f32 %v35, %v135
    %v137 = vpop.f32.mrb[0].mxu0
    %138 = vmatprep.mubr.f32.mxu0 0.0
    %139 = vmatmul.mubr.f32.gmra.mrb[0].mxu0 %v55
    %v140 = vpop.f32.mrb[0].mxu0
    %v141 = vadd.f32 %v40, %v140
    %v142 = vpop.f32.mrb[0].mxu0
    %143 = vmatprep.mubr.f32.mxu0 0.0
    %144 = vmatmul.mubr.f32.gmra.mrb[0].mxu0 %v58
    %v145 = vpop.f32.mrb[0].mxu0
    %v146 = vadd.f32 %v45, %v145
    %v147 = vpop.f32.mrb[0].mxu0
    %148 = vdwg.mxu0
    %v149 = vmax.f32 %v131, 0.0
    %v150 = vmax.f32 %v136, 0.0
    %v151 = vmax.f32 %v141, 0.0
    %v152 = vmax.f32 %v146, 0.0
    %v153 = vadd.f32 %v149, %v150
    %v154 = vadd.f32 %v153, %v151
    %v155 = vadd.f32 %v154, %v152
    %v156 = vrot.slane %v155, 4
    %v157 = vadd.f32 %v155, %v156
    %v158 = vrot.slane %v157, 2
    %v159 = vadd.f32 %v157, %v158
    %v160 = vrot.slane %v159, 1
    %v161 = vadd.f32 %v159, %v160
    %v162 = vmul.f32 %v161, 0.03125
    %v163 = vmul.f32 %v149, %v149
    %v164 = vmul.f32 %v150, %v150
    %v165 = vmul.f32 %v151, %v151
    %v166 = vmul.f32 %v152, %v152
    %v167 = vadd.f32 %v163, %v164
    %v168 = vadd.f32 %v167, %v165
    %v169 = vadd.f32 %v168, %v166
    %v170 = vrot.slane %v169, 4
    %v171 = vadd.f32 %v169, %v170
    %v172 = vrot.slane %v171, 2
    %v173 = vadd.f32 %v171, %v172
    %v174 = vrot.slane %v173, 1
    %v175 = vadd.f32 %v173, %v174
    %v176 = vmul.f32 %v175, 0.03125
    %v177 = vmul.f32 %v162, %v162
    %v178 = vsub.f32 %v176, %v177
    %v179 = vmax.f32 %v178, 0.0
    %v180 = vadd.f32 %v179, 1e-05
    %v181 = vrsqrt.pop %v180
    %v182 = vsub.f32 %v149, %v162
    %v183 = vsub.f32 %v150, %v162
    %v184 = vsub.f32 %v151, %v162
    %v185 = vsub.f32 %v152, %v162
    %v186 = vmul.f32 %v182, %v181
    %v187 = vmul.f32 %v183, %v181
    %v188 = vmul.f32 %v184, %v181
    %v189 = vmul.f32 %v185, %v181
    %190 = vset.pattern.permute.xlu0 1
    %191 = vperm.xlu0 %190, %v21
    %v192 = vpop.permute.xlu0 %191
    %194 = vset.pattern.permute.xlu0 1
    %195 = vperm.xlu0 %194, %v22
    %v196 = vpop.permute.xlu0 %195
    %198 = vset.pattern.permute.xlu0 1
    %199 = vperm.xlu0 %198, %v23
    %v200 = vpop.permute.xlu0 %199
    %202 = vset.pattern.permute.xlu0 1
    %203 = vperm.xlu0 %202, %v24
    %v204 = vpop.permute.xlu0 %203
    %v206 = vmul.f32 %v186, %v192
    %v207 = vmul.f32 %v187, %v196
    %v208 = vmul.f32 %v188, %v200
    %v209 = vmul.f32 %v189, %v204
    %210 = vset.pattern.permute.xlu0 2
    %211 = vperm.xlu0 %210, %v21
    %v212 = vpop.permute.xlu0 %211
    %214 = vset.pattern.permute.xlu0 2
    %215 = vperm.xlu0 %214, %v22
    %v216 = vpop.permute.xlu0 %215
    %218 = vset.pattern.permute.xlu0 2
    %219 = vperm.xlu0 %218, %v23
    %v220 = vpop.permute.xlu0 %219
    %222 = vset.pattern.permute.xlu0 2
    %223 = vperm.xlu0 %222, %v24
    %v224 = vpop.permute.xlu0 %223
    %v226 = vadd.f32 %v206, %v212
    %v227 = vadd.f32 %v207, %v216
    %v228 = vadd.f32 %v208, %v220
    %v229 = vadd.f32 %v209, %v224
    %230 = vset.pattern.permute.xlu0 3
    %231 = vperm.xlu0 %230, %v21
    %v232 = vpop.permute.xlu0 %231
    %234 = vset.pattern.permute.xlu0 3
    %235 = vperm.xlu0 %234, %v22
    %v236 = vpop.permute.xlu0 %235
    %238 = vset.pattern.permute.xlu0 3
    %239 = vperm.xlu0 %238, %v23
    %v240 = vpop.permute.xlu0 %239
    %242 = vset.pattern.permute.xlu0 3
    %243 = vperm.xlu0 %242, %v24
    %v244 = vpop.permute.xlu0 %243
    %vm246 = vcmask 261120
    %v248 = vsel %vm246, %v16, 0
    %v251 = vsel %vm246, %v17, 0
    %v254 = vsel %vm246, %v18, 0
    %v257 = vsel %vm246, %v19, 0
    %259 = vmatprep.subr.mxu0 0.0
    %260 = vmatpush1.msra.mxu0 %v226
    %261 = vmatprep.subr.mxu0 0.0
    %262 = vmatpush1.msra.mxu0 %v227
    %263 = vmatprep.subr.mxu0 0.0
    %264 = vmatpush1.msra.mxu0 %v228
    %265 = vmatprep.subr.mxu0 0.0
    %266 = vmatpush1.msra.mxu0 %v229
    %267 = vmatprep.subr.mxu0 0.0
    %268 = vmatpush1.msra.mxu0 0.0
    %269 = vmatprep.subr.mxu0 0.0
    %270 = vmatpush1.msra.mxu0 0.0
    %271 = vmatprep.subr.mxu0 0.0
    %272 = vmatpush1.msra.mxu0 0.0
    %273 = vmatprep.subr.mxu0 0.0
    %274 = vmatpush1.msra.mxu0 0.0
    %275 = vmatprep.subr.mxu0 0.0
    %276 = vmatpush1.msra.mxu0 0.0
    %277 = vmatprep.subr.mxu0 0.0
    %278 = vmatpush1.msra.mxu0 0.0
    %279 = vmatprep.subr.mxu0 0.0
    %280 = vmatpush1.msra.mxu0 0.0
    %281 = vmatprep.subr.mxu0 0.0
    %282 = vmatpush1.msra.mxu0 0.0
    %283 = vmatprep.subr.mxu0 0.0
    %284 = vmatpush1.msra.mxu0 0.0
    %285 = vmatprep.subr.mxu0 0.0
    %286 = vmatpush1.msra.mxu0 0.0
    %287 = vmatprep.subr.mxu0 0.0
    %288 = vmatpush1.msra.mxu0 0.0
    %289 = vmatprep.subr.mxu0 0.0
    %290 = vmatpush1.msra.mxu0 0.0
    %291 = vmatprep.subr.mxu0 0.0
    %292 = vmatpush1.msra.mxu0 0.0
    %293 = vmatprep.subr.mxu0 0.0
    %294 = vmatpush1.msra.mxu0 0.0
    %295 = vmatprep.subr.mxu0 0.0
    %296 = vmatpush1.msra.mxu0 0.0
    %297 = vmatprep.subr.mxu0 0.0
    %298 = vmatpush1.msra.mxu0 0.0
    %299 = vmatprep.subr.mxu0 0.0
    %300 = vmatpush1.msra.mxu0 0.0
    %301 = vmatprep.subr.mxu0 0.0
    %302 = vmatpush1.msra.mxu0 0.0
    %303 = vmatprep.subr.mxu0 0.0
    %304 = vmatpush1.msra.mxu0 0.0
    %305 = vmatprep.subr.mxu0 0.0
    %306 = vmatpush1.msra.mxu0 0.0
    %307 = vmatprep.subr.mxu0 0.0
    %308 = vmatpush1.msra.mxu0 0.0
    %309 = vmatprep.subr.mxu0 0.0
    %310 = vmatpush1.msra.mxu0 0.0
    %311 = vmatprep.subr.mxu0 0.0
    %312 = vmatpush1.msra.mxu0 0.0
    %313 = vmatprep.subr.mxu0 0.0
    %314 = vmatpush1.msra.mxu0 0.0
    %315 = vmatprep.subr.mxu0 0.0
    %316 = vmatpush1.msra.mxu0 0.0
    %317 = vmatprep.subr.mxu0 0.0
    %318 = vmatpush1.msra.mxu0 0.0
    %319 = vmatprep.subr.mxu0 0.0
    %320 = vmatpush1.msra.mxu0 0.0
    %321 = vmatprep.subr.mxu0 0.0
    %322 = vmatpush1.msra.mxu0 0.0
    %323 = vmatprep.mubr.f32.mxu0 0.0
    %324 = vmatmul.mubr.f32.gmra.mrb[0].mxu0 %v248
    %v325 = vpop.f32.mrb[0].mxu0
    %v326 = vadd.f32 %v232, %v325
    %v327 = vpop.f32.mrb[0].mxu0
    %328 = vmatprep.mubr.f32.mxu0 0.0
    %329 = vmatmul.mubr.f32.gmra.mrb[0].mxu0 %v251
    %v330 = vpop.f32.mrb[0].mxu0
    %v331 = vadd.f32 %v236, %v330
    %v332 = vpop.f32.mrb[0].mxu0
    %333 = vmatprep.mubr.f32.mxu0 0.0
    %334 = vmatmul.mubr.f32.gmra.mrb[0].mxu0 %v254
    %v335 = vpop.f32.mrb[0].mxu0
    %v336 = vadd.f32 %v240, %v335
    %v337 = vpop.f32.mrb[0].mxu0
    %338 = vmatprep.mubr.f32.mxu0 0.0
    %339 = vmatmul.mubr.f32.gmra.mrb[0].mxu0 %v257
    %v340 = vpop.f32.mrb[0].mxu0
    %v341 = vadd.f32 %v244, %v340
    %v342 = vpop.f32.mrb[0].mxu0
    %343 = vdwg.mxu0
    %v344 = vmax.f32 %v326, 0.0
    %v345 = vmax.f32 %v331, 0.0
    %v346 = vmax.f32 %v336, 0.0
    %v347 = vmax.f32 %v341, 0.0
    %v348 = vadd.f32 %v344, %v345
    %v349 = vadd.f32 %v348, %v346
    %v350 = vadd.f32 %v349, %v347
    %v351 = vrot.slane %v350, 4
    %v352 = vadd.f32 %v350, %v351
    %v353 = vrot.slane %v352, 2
    %v354 = vadd.f32 %v352, %v353
    %v355 = vrot.slane %v354, 1
    %v356 = vadd.f32 %v354, %v355
    %v357 = vmul.f32 %v356, 0.03125
    %v358 = vmul.f32 %v344, %v344
    %v359 = vmul.f32 %v345, %v345
    %v360 = vmul.f32 %v346, %v346
    %v361 = vmul.f32 %v347, %v347
    %v362 = vadd.f32 %v358, %v359
    %v363 = vadd.f32 %v362, %v360
    %v364 = vadd.f32 %v363, %v361
    %v365 = vrot.slane %v364, 4
    %v366 = vadd.f32 %v364, %v365
    %v367 = vrot.slane %v366, 2
    %v368 = vadd.f32 %v366, %v367
    %v369 = vrot.slane %v368, 1
    %v370 = vadd.f32 %v368, %v369
    %v371 = vmul.f32 %v370, 0.03125
    %v372 = vmul.f32 %v357, %v357
    %v373 = vsub.f32 %v371, %v372
    %v374 = vmax.f32 %v373, 0.0
    %v375 = vadd.f32 %v374, 1e-05
    %v376 = vrsqrt.pop %v375
    %v377 = vsub.f32 %v344, %v357
    %v378 = vsub.f32 %v345, %v357
    %v379 = vsub.f32 %v346, %v357
    %v380 = vsub.f32 %v347, %v357
    %v381 = vmul.f32 %v377, %v376
    %v382 = vmul.f32 %v378, %v376
    %v383 = vmul.f32 %v379, %v376
    %v384 = vmul.f32 %v380, %v376
    %385 = vset.pattern.permute.xlu0 4
    %386 = vperm.xlu0 %385, %v21
    %v387 = vpop.permute.xlu0 %386
    %389 = vset.pattern.permute.xlu0 4
    %390 = vperm.xlu0 %389, %v22
    %v391 = vpop.permute.xlu0 %390
    %393 = vset.pattern.permute.xlu0 4
    %394 = vperm.xlu0 %393, %v23
    %v395 = vpop.permute.xlu0 %394
    %397 = vset.pattern.permute.xlu0 4
    %398 = vperm.xlu0 %397, %v24
    %v399 = vpop.permute.xlu0 %398
    %v401 = vmul.f32 %v381, %v387
    %v402 = vmul.f32 %v382, %v391
    %v403 = vmul.f32 %v383, %v395
    %v404 = vmul.f32 %v384, %v399
    %405 = vset.pattern.permute.xlu0 5
    %406 = vperm.xlu0 %405, %v21
    %v407 = vpop.permute.xlu0 %406
    %409 = vset.pattern.permute.xlu0 5
    %410 = vperm.xlu0 %409, %v22
    %v411 = vpop.permute.xlu0 %410
    %413 = vset.pattern.permute.xlu0 5
    %414 = vperm.xlu0 %413, %v23
    %v415 = vpop.permute.xlu0 %414
    %417 = vset.pattern.permute.xlu0 5
    %418 = vperm.xlu0 %417, %v24
    %v419 = vpop.permute.xlu0 %418
    %v421 = vadd.f32 %v401, %v407
    %v422 = vadd.f32 %v402, %v411
    %v423 = vadd.f32 %v403, %v415
    %v424 = vadd.f32 %v404, %v419
    %425 = vset.pattern.permute.xlu0 6
    %426 = vperm.xlu0 %425, %v21
    %v427 = vpop.permute.xlu0 %426
    %v430 = vsel %vm246, %v20, 0
    %432 = vmatprep.subr.mxu0 0.0
    %433 = vmatpush1.msra.mxu0 %v421
    %434 = vmatprep.subr.mxu0 0.0
    %435 = vmatpush1.msra.mxu0 %v422
    %436 = vmatprep.subr.mxu0 0.0
    %437 = vmatpush1.msra.mxu0 %v423
    %438 = vmatprep.subr.mxu0 0.0
    %439 = vmatpush1.msra.mxu0 %v424
    %440 = vmatprep.subr.mxu0 0.0
    %441 = vmatpush1.msra.mxu0 0.0
    %442 = vmatprep.subr.mxu0 0.0
    %443 = vmatpush1.msra.mxu0 0.0
    %444 = vmatprep.subr.mxu0 0.0
    %445 = vmatpush1.msra.mxu0 0.0
    %446 = vmatprep.subr.mxu0 0.0
    %447 = vmatpush1.msra.mxu0 0.0
    %448 = vmatprep.subr.mxu0 0.0
    %449 = vmatpush1.msra.mxu0 0.0
    %450 = vmatprep.subr.mxu0 0.0
    %451 = vmatpush1.msra.mxu0 0.0
    %452 = vmatprep.subr.mxu0 0.0
    %453 = vmatpush1.msra.mxu0 0.0
    %454 = vmatprep.subr.mxu0 0.0
    %455 = vmatpush1.msra.mxu0 0.0
    %456 = vmatprep.subr.mxu0 0.0
    %457 = vmatpush1.msra.mxu0 0.0
    %458 = vmatprep.subr.mxu0 0.0
    %459 = vmatpush1.msra.mxu0 0.0
    %460 = vmatprep.subr.mxu0 0.0
    %461 = vmatpush1.msra.mxu0 0.0
    %462 = vmatprep.subr.mxu0 0.0
    %463 = vmatpush1.msra.mxu0 0.0
    %464 = vmatprep.subr.mxu0 0.0
    %465 = vmatpush1.msra.mxu0 0.0
    %466 = vmatprep.subr.mxu0 0.0
    %467 = vmatpush1.msra.mxu0 0.0
    %468 = vmatprep.subr.mxu0 0.0
    %469 = vmatpush1.msra.mxu0 0.0
    %470 = vmatprep.subr.mxu0 0.0
    %471 = vmatpush1.msra.mxu0 0.0
    %472 = vmatprep.subr.mxu0 0.0
    %473 = vmatpush1.msra.mxu0 0.0
    %474 = vmatprep.subr.mxu0 0.0
    %475 = vmatpush1.msra.mxu0 0.0
    %476 = vmatprep.subr.mxu0 0.0
    %477 = vmatpush1.msra.mxu0 0.0
    %478 = vmatprep.subr.mxu0 0.0
    %479 = vmatpush1.msra.mxu0 0.0
    %480 = vmatprep.subr.mxu0 0.0
    %481 = vmatpush1.msra.mxu0 0.0
    %482 = vmatprep.subr.mxu0 0.0
    %483 = vmatpush1.msra.mxu0 0.0
    %484 = vmatprep.subr.mxu0 0.0
    %485 = vmatpush1.msra.mxu0 0.0
    %486 = vmatprep.subr.mxu0 0.0
    %487 = vmatpush1.msra.mxu0 0.0
    %488 = vmatprep.subr.mxu0 0.0
    %489 = vmatpush1.msra.mxu0 0.0
    %490 = vmatprep.subr.mxu0 0.0
    %491 = vmatpush1.msra.mxu0 0.0
    %492 = vmatprep.subr.mxu0 0.0
    %493 = vmatpush1.msra.mxu0 0.0
    %494 = vmatprep.subr.mxu0 0.0
    %495 = vmatpush1.msra.mxu0 0.0
    %496 = vmatprep.mubr.f32.mxu0 0.0
    %497 = vmatmul.mubr.f32.gmra.mrb[0].mxu0 %v430
    %v498 = vpop.f32.mrb[0].mxu0
    %v499 = vadd.f32 %v427, %v498
    %v500 = vpop.f32.mrb[0].mxu0
    %501 = vdwg.mxu0
    %502 = vst [vmem:[#allocation2] sm:$0xff] %v499
    // Predicated region
    $region10: #{tpu_custom_call.1} parent=1 // pred_check
      _
    $region11: #{tpu_custom_call.1} parent=1 // pred_check_branch
      %504 = sbr.rel (0) target = $region13
    $region12: #{tpu_custom_call.1} parent=1 // pred_region
      %s506 = ssub.s32 128, 128
      %507 = vsyncadd [#allocation3], %s506
      %s509 = sshll.u32 [#allocation2], 4
      %s510 = int_to_ptr.vmem [resolvable:$true] %s509
      %512 = dma.vmem_to_hbm [thread:$0]  %s510, 128, %s2, [#allocation3]
    $region13: #{tpu_custom_call.1} parent=1 // pred_fallthru
      _
    // Predicated region
    $region14: #{tpu_custom_call.1} parent=1 // pred_check
      _
    $region15: #{tpu_custom_call.1} parent=1 // pred_check_branch
      %514 = sbr.rel (0) target = $region17
    $region16: #{tpu_custom_call.1} parent=1 // pred_region
      %515 = dma.done [#allocation3], 128
    $region17: #{tpu_custom_call.1} parent=1 // pred_fallthru
      _
    %516 = vsyncpa [#allocation3], 1

</llo_original>
